<compile_context>
chip_gen: v7x
topology: tpu7x:2x2x1
jax: 0.10.0
libtpu: 0.0.40
codegen_flags: <defaults>
</compile_context>

<pallas_src>
import functools

import jax
import jax.numpy as jnp
from jax.experimental import pallas as pl
from jax.experimental.pallas import tpu as pltpu


@functools.lru_cache(maxsize=None)
def _vmem_budget_bytes():
    """~75% of physical VMEM; conservative 48 MiB (safe on v7x) if unknown."""
    cap = None
    try:
        info = pltpu.get_tpu_info()
        for name in ("vmem_capacity_bytes", "vmem_size_bytes", "vmem_bytes"):
            v = getattr(info, name, None)
            if v:
                cap = int(v)
                break
    except Exception:
        cap = None
    if not cap:
        cap = 64 * 1024 * 1024
    budget = (cap * 3) // 4
    return max(32 * 1024 * 1024, min(budget, 100 * 1024 * 1024))


def _choose_tiles(c, hw_pad, itemsize, max_block_bytes):
    """Pick (tile_c, tile_hw): lane-dense 128-multiple HW tiles, C tiled in
    multiples of 8 sublanes only when a full-C 128-lane block would not fit."""
    if c * 128 * itemsize <= max_block_bytes:
        tile_c = c
    else:
        cands = [d for d in range(8, c, 8)
                 if c % d == 0 and d * 128 * itemsize <= max_block_bytes]
        tile_c = max(cands) if cands else c  # fall back to full C (still correct)
    divisors = [t for t in range(128, hw_pad + 1, 128) if hw_pad % t == 0]
    fitting = [t for t in divisors if tile_c * t * itemsize <= max_block_bytes]
    tile_hw = max(fitting) if fitting else min(divisors)
    return tile_c, tile_hw


# ---------------------------------------------------------------------------
# Fused single-pass kernel: pool + excitation MLP + scale for one batch slab.
# ---------------------------------------------------------------------------
def _fused_kernel(x_ref, w1_ref, w2_ref, o_ref, *, inv_hw):
    x = x_ref[...]                                                 # (1, C, HW)
    pooled = jnp.sum(x.astype(jnp.float32), axis=2) * inv_hw       # (1, C) f32
    # Excitation MLP via broadcast-multiply + reduce: negligible FLOPs and
    # avoids MXU tile-shape constraints for arbitrary (C, C//reduction).
    h = jnp.sum(pooled[:, :, None] * w1_ref[...][None, :, :], axis=1)   # (1, C_red)
    h = jnp.maximum(h, 0.0)
    z = jnp.sum(h[:, :, None] * w2_ref[...][None, :, :], axis=1)        # (1, C)
    y = 1.0 / (1.0 + jnp.exp(-z))                                       # sigmoid
    o_ref[...] = x * y[:, :, None].astype(x.dtype)


def _se_fused(x3, w1, w2, vmem_limit):
    B, C, HW = x3.shape
    c_red = w1.shape[1]
    w1f = w1.astype(jnp.float32)
    w2f = w2.astype(jnp.float32)
    kernel = functools.partial(_fused_kernel, inv_hw=1.0 / HW)
    return pl.pallas_call(
        kernel,
        out_shape=jax.ShapeDtypeStruct((B, C, HW), x3.dtype),
        grid_spec=pltpu.PrefetchScalarGridSpec(
            num_scalar_prefetch=0,
            grid=(B,),
            in_specs=[pl.BlockSpec((1, C, HW), lambda b: (b, 0, 0)),
                      pl.BlockSpec((C, c_red), lambda b: (0, 0)),
                      pl.BlockSpec((c_red, C), lambda b: (0, 0))],
            out_specs=pl.BlockSpec((1, C, HW), lambda b: (b, 0, 0)),
        ),
        compiler_params=pltpu.CompilerParams(
            dimension_semantics=("parallel",),
            vmem_limit_bytes=vmem_limit),
    )(x3, w1f, w2f)


# ---------------------------------------------------------------------------
# Two-pass streaming kernels (fallback for slabs that do not fit in VMEM).
# ---------------------------------------------------------------------------
def _pool_kernel(x_ref, sum_ref):
    # x_ref: (1, tile_c, tile_hw) native; sum_ref: (1, tile_c, 1) f32 resident
    # accumulator (C stays on sublanes -> no relayout in the hot loop).
    @pl.when(pl.program_id(3) == 0)
    def _():
        sum_ref[...] = jnp.zeros_like(sum_ref)

    sum_ref[...] += jnp.sum(x_ref[...].astype(jnp.float32), axis=2, keepdims=True)


def _scale_kernel(x_ref, y_ref, o_ref):
    # x_ref: (1, tile_c, tile_hw), y_ref: (1, tile_c, 1) -- native dtype,
    # broadcast along the lane (HW) axis, lane-dense stores.
    o_ref[...] = x_ref[...] * y_ref[...]


def _se_two_pass(x3, w1, w2, max_block_bytes, vmem_limit):
    B, C, HW = x3.shape
    itemsize = x3.dtype.itemsize

    # Pad HW to a multiple of 128 so every tile is lane-dense (zeros are
    # harmless for the sum; padded output columns are sliced off below).
    pad = (-HW) % 128
    x3p = jnp.pad(x3, ((0, 0), (0, 0), (0, pad))) if pad else x3
    HWp = HW + pad

    tile_c, tile_hw = _choose_tiles(C, HWp, itemsize, max_block_bytes)
    n_c = C // tile_c
    num_hw = HWp // tile_hw

    # Split the reduction so both TensorCores (v7x megacore) stay busy at B==1.
    n_split = 2 if (B == 1 and num_hw % 2 == 0) else 1
    hw_inner = num_hw // n_split

    # ---- pass 1: global sum (divide by the true HW in XLA) ----
    sums = pl.pallas_call(
        _pool_kernel,
        out_shape=jax.ShapeDtypeStruct((B * n_split, C, 1), jnp.float32),
        grid_spec=pltpu.PrefetchScalarGridSpec(
            num_scalar_prefetch=0,
            grid=(B, n_split, n_c, hw_inner),
            in_specs=[pl.BlockSpec(
                (1, tile_c, tile_hw),
                lambda b, s, ci, t: (b, ci, s * hw_inner + t))],
            out_specs=pl.BlockSpec(
                (1, tile_c, 1),
                lambda b, s, ci, t: (b * n_split + s, ci, 0)),
        ),
        compiler_params=pltpu.CompilerParams(
            dimension_semantics=("parallel", "parallel", "parallel", "arbitrary"),
            vmem_limit_bytes=vmem_limit),
    )(x3p)

    pooled = sums.reshape(B, n_split, C).sum(axis=1) * (1.0 / HW)    # (B, C) f32

    # ---- excitation MLP: tiny, kept in XLA off the streaming critical path ----
    h = jnp.maximum(pooled @ w1.astype(jnp.float32), 0.0)
    y = jax.nn.sigmoid(h @ w2.astype(jnp.float32))                   # (B, C) f32
    y3 = y.astype(x3.dtype).reshape(B, C, 1)

    # ---- pass 2: per-channel scaling (pure streaming) ----
    out3 = pl.pallas_call(
        _scale_kernel,
        out_shape=jax.ShapeDtypeStruct((B, C, HWp), x3.dtype),
        grid_spec=pltpu.PrefetchScalarGridSpec(
            num_scalar_prefetch=0,
            grid=(B, n_c, num_hw),
            in_specs=[pl.BlockSpec((1, tile_c, tile_hw), lambda b, ci, t: (b, ci, t)),
                      pl.BlockSpec((1, tile_c, 1), lambda b, ci, t: (b, ci, 0))],
            out_specs=pl.BlockSpec((1, tile_c, tile_hw), lambda b, ci, t: (b, ci, t)),
        ),
        compiler_params=pltpu.CompilerParams(
            dimension_semantics=("parallel", "parallel", "parallel"),
            vmem_limit_bytes=vmem_limit),
    )(x3p, y3)

    return out3[:, :, :HW] if pad else out3


# ---------------------------------------------------------------------------
# Public entry point.
# ---------------------------------------------------------------------------
def se_block_2d(x, w1, w2, *, force_two_pass=False, max_block_bytes=None):
    """x: (B, C, H, W) NCHW; w1: (C, C_red); w2: (C_red, C)."""
    B, C, H, W = x.shape
    HW = H * W
    x3 = x.reshape(B, C, HW)

    budget = _vmem_budget_bytes()
    slab_bytes = C * HW * x.dtype.itemsize

    # Fused path: slab x2 (double-buffered in) + x2 (out) + f32 temp headroom.
    if (not force_two_pass) and slab_bytes * 6 <= budget:
        out3 = _se_fused(x3, w1, w2, vmem_limit=budget)
    else:
        mbb = max_block_bytes if max_block_bytes is not None else min(
            8 * 1024 * 1024, budget // 8)
        out3 = _se_two_pass(x3, w1, w2, mbb, budget)

    return out3.reshape(B, C, H, W)


def init_params(key, channels, reduction=16):
    """Matches nn.Linear(channels, channels//reduction, bias=False) and
    nn.Linear(channels//reduction, channels, bias=False); weights stored
    transposed (in_features, out_features) so y = x @ W."""
    c_red = channels // reduction
    k1, k2 = jax.random.split(key)
    bound1 = 1.0 / (channels ** 0.5)
    bound2 = 1.0 / (c_red ** 0.5)
    w1 = jax.random.uniform(k1, (channels, c_red), jnp.float32, -bound1, bound1)
    w2 = jax.random.uniform(k2, (c_red, channels), jnp.float32, -bound2, bound2)
    return w1, w2


def se_block_ref(x, w1, w2):
    """Pure-JAX reference for correctness checking."""
    pooled = jnp.mean(x, axis=(2, 3))                     # (B, C)
    h = jnp.maximum(pooled @ w1, 0.0)
    y = jax.nn.sigmoid(h @ w2)
    return x * y[:, :, None, None]


if __name__ == "__main__":
    key = jax.random.PRNGKey(0)
    kx1, kx2, kx3, kp = jax.random.split(key, 4)

    B, C, reduction = 2, 32, 16          # channels=32, reduction=16 -> hidden=2
    w1, w2 = init_params(kp, C, reduction)

    def check(x, name, **kw):
        out = jax.block_until_ready(se_block_2d(x, w1, w2, **kw))
        ref = se_block_ref(x, w1, w2)
        assert out.shape == x.shape, f"shape mismatch: {name}"
        assert jnp.allclose(out, ref, atol=1e-5, rtol=1e-5), f"mismatch vs reference: {name}"

    # fused single-pass path, 128-multiple HW
    x1 = jax.random.normal(kx1, (B, C, 16, 16), dtype=jnp.float32)
    check(x1, "fused 16x16")

    # fused path, odd HW (full-extent block, no padding needed)
    x2 = jax.random.normal(kx2, (B, C, 7, 7), dtype=jnp.float32)
    check(x2, "fused 7x7")

    # two-pass streaming path (forced), lane-dense tiles
    check(x1, "two-pass 16x16", force_two_pass=True)

    # two-pass path with odd HW -> padded to a 128 multiple, sliced back
    check(x2, "two-pass 7x7 padded", force_two_pass=True)

    # two-pass path exercising C-tiling + split reduction (B=1, tiny block cap)
    x3 = jax.random.normal(kx3, (1, C, 32, 32), dtype=jnp.float32)
    check(x3, "two-pass C-tiled split", force_two_pass=True, max_block_bytes=4096)

    print("KERNEL_OK")
</pallas_src>

<mosaic_0001>
module attributes {stable_mosaic.version = 11 : i64} {
  func.func @_fused_kernel(%arg0: i32, %arg1: memref<1x32x256xf32, #tpu.memory_space<vmem>>, %arg2: memref<32x2xf32, #tpu.memory_space<vmem>>, %arg3: memref<2x32xf32, #tpu.memory_space<vmem>>, %arg4: memref<1x32x256xf32, #tpu.memory_space<vmem>>) attributes {dimension_semantics = [#tpu.dimension_semantics<parallel>], iteration_bounds = array<i64: 2>, scalar_prefetch = 0 : i64, scratch_operands = 0 : i64, tpu.core_type = #tpu.core_type<tc>, window_params = [{transform_indices = @transform_0, window_bounds = array<i64: 1, 32, 256>}, {pipeline_mode = #tpu.pipeline_mode<synchronous>, transform_indices = @transform_1, window_bounds = array<i64: 32, 2>}, {pipeline_mode = #tpu.pipeline_mode<synchronous>, transform_indices = @transform_2, window_bounds = array<i64: 2, 32>}, {transform_indices = @transform_3, window_bounds = array<i64: 1, 32, 256>}]} {
    %c0 = arith.constant 0 : index
    %c0_0 = arith.constant 0 : index
    %c0_1 = arith.constant 0 : index
    %0 = vector.load %arg1[%c0, %c0_0, %c0_1] : memref<1x32x256xf32, #tpu.memory_space<vmem>>, vector<1x32x256xf32>
    %cst = arith.constant dense<0.000000e+00> : vector<1x32xf32>
    %1 = vector.multi_reduction <add>, %0, %cst [2] : vector<1x32x256xf32> to vector<1x32xf32>
    %cst_2 = arith.constant 3.906250e-03 : f32
    %2 = vector.broadcast %cst_2 : f32 to vector<1x32xf32>
    %3 = arith.mulf %1, %2 : vector<1x32xf32>
    %4 = vector.shape_cast %3 : vector<1x32xf32> to vector<1x32x1xf32>
    %c0_3 = arith.constant 0 : index
    %c0_4 = arith.constant 0 : index
    %5 = vector.load %arg2[%c0_3, %c0_4] : memref<32x2xf32, #tpu.memory_space<vmem>>, vector<32x2xf32>
    %6 = vector.shape_cast %5 : vector<32x2xf32> to vector<1x32x2xf32>
    %7 = vector.broadcast %4 : vector<1x32x1xf32> to vector<1x32x2xf32>
    %8 = arith.mulf %7, %6 : vector<1x32x2xf32>
    %cst_5 = arith.constant dense<0.000000e+00> : vector<1x2xf32>
    %9 = vector.multi_reduction <add>, %8, %cst_5 [1] : vector<1x32x2xf32> to vector<1x2xf32>
    %cst_6 = arith.constant 0.000000e+00 : f32
    %10 = vector.broadcast %cst_6 : f32 to vector<1x2xf32>
    %11 = arith.maximumf %9, %10 : vector<1x2xf32>
    %12 = vector.shape_cast %11 : vector<1x2xf32> to vector<1x2x1xf32>
    %c0_7 = arith.constant 0 : index
    %c0_8 = arith.constant 0 : index
    %13 = vector.load %arg3[%c0_7, %c0_8] : memref<2x32xf32, #tpu.memory_space<vmem>>, vector<2x32xf32>
    %14 = vector.shape_cast %13 : vector<2x32xf32> to vector<1x2x32xf32>
    %15 = vector.broadcast %12 : vector<1x2x1xf32> to vector<1x2x32xf32>
    %16 = arith.mulf %15, %14 : vector<1x2x32xf32>
    %cst_9 = arith.constant dense<0.000000e+00> : vector<1x32xf32>
    %17 = vector.multi_reduction <add>, %16, %cst_9 [1] : vector<1x2x32xf32> to vector<1x32xf32>
    %cst_10 = arith.constant 0.000000e+00 : f32
    %18 = vector.broadcast %cst_10 : f32 to vector<1x32xf32>
    %19 = arith.subf %18, %17 : vector<1x32xf32>
    %20 = math.exp %19 : vector<1x32xf32>
    %cst_11 = arith.constant 1.000000e+00 : f32
    %21 = vector.broadcast %cst_11 : f32 to vector<1x32xf32>
    %22 = arith.addf %21, %20 : vector<1x32xf32>
    %cst_12 = arith.constant 1.000000e+00 : f32
    %23 = vector.broadcast %cst_12 : f32 to vector<1x32xf32>
    %24 = arith.divf %23, %22 : vector<1x32xf32>
    %25 = vector.shape_cast %24 : vector<1x32xf32> to vector<1x32x1xf32>
    %26 = vector.broadcast %25 : vector<1x32x1xf32> to vector<1x32x256xf32>
    %27 = arith.mulf %0, %26 : vector<1x32x256xf32>
    %c0_13 = arith.constant 0 : index
    %c0_14 = arith.constant 0 : index
    %c0_15 = arith.constant 0 : index
    %28 = vector.load %arg4[%c0_13, %c0_14, %c0_15] : memref<1x32x256xf32, #tpu.memory_space<vmem>>, vector<1x32x256xf32>
    tpu.vector_store %arg4[%c0_13, %c0_14, %c0_15], %27 {strides = array<i32>} : memref<1x32x256xf32, #tpu.memory_space<vmem>>, vector<1x32x256xf32>,
    return
  }
  func.func @transform_0(%arg0: i32) -> (i32, i32, i32) {
    %c0_i32 = arith.constant 0 : i32
    %c0_i32_0 = arith.constant 0 : i32
    %c0_i32_1 = arith.constant 0 : i32
    return %arg0, %c0_i32, %c0_i32_0 : i32, i32, i32
  }
  func.func @transform_1(%arg0: i32) -> (i32, i32) {
    %c0_i32 = arith.constant 0 : i32
    %c0_i32_0 = arith.constant 0 : i32
    %c0_i32_1 = arith.constant 0 : i32
    return %c0_i32, %c0_i32_0 : i32, i32
  }
  func.func @transform_2(%arg0: i32) -> (i32, i32) {
    %c0_i32 = arith.constant 0 : i32
    %c0_i32_0 = arith.constant 0 : i32
    %c0_i32_1 = arith.constant 0 : i32
    return %c0_i32, %c0_i32_0 : i32, i32
  }
  func.func @transform_3(%arg0: i32) -> (i32, i32, i32) {
    %c0_i32 = arith.constant 0 : i32
    %c0_i32_0 = arith.constant 0 : i32
    %c0_i32_1 = arith.constant 0 : i32
    return %arg0, %c0_i32, %c0_i32_0 : i32, i32, i32
  }
}

</mosaic_0001>

<llo_original>
// kernel: tpu_custom_call.1
$region0: #{tpu_custom_call.1}
  #allocation0 [shape = 'u32[]', space=smem, size = 0x4, offset = 0x4, fixed_abs, tag = 'smem constant byte address 0x4 - core index']
  #allocation1 [shape = 'u32[144,128]{1,0:T(1,128)}', space=vmem, size = 0x12000, scoped, tag = 'internal scratch']
  %s0 = inlined_call_operand.hbm [shape: f32[2,32,256], index: 0, kind: input, shape index: {}]
  %s1 = inlined_call_operand.vmem [shape: f32[32,2], index: 1, kind: input, shape index: {}]
  %s2 = inlined_call_operand.vmem [shape: f32[2,32], index: 2, kind: input, shape index: {}]
  %s3 = inlined_call_operand.hbm [shape: f32[2,32,256], index: 3, kind: output, shape index: {}]
  %s4 = sld [smem:[#allocation0]]
  $region49: #{tpu_custom_call.1} parent=0
    _
  %s6 = ssub.s32 1, %s4
  %s7 = scalar_select 0, %s6, %s4
  $region1: #{tpu_custom_call.1} parent=0
    #allocation2 [shape = 'u8[65536]{0}', space=vmem, size = 0x10000, scoped, tag = 'input window, operand 0']
    #allocation3 [shape = 's32[2]{0}', space=sflag, size = 0x8, scoped, tag = 'scoped memory for tpu_custom_call.1']
    #allocation4 [shape = 's32[2]{0}', space=sflag, size = 0x8, scoped, tag = 'scoped memory for tpu_custom_call.1']
    #allocation5 [shape = 'u8[65536]{0}', space=vmem, size = 0x10000, scoped, tag = 'output window, operand 0']
    %8 = vsyncpa [#allocation3], 0
    %s9 = scalar_lea.sflag [#allocation3], 1
    %10 = vsyncpa %s9, 0
    %11 = vsyncpa [#allocation4], 0
    %s12 = scalar_lea.sflag [#allocation4], 1
    %13 = vsyncpa %s12, 0
    loop: start=0, step=1, limit=4
    $region2: #{tpu_custom_call.1} parent=1 // loop_pre_header
      _
    $region3: #{tpu_custom_call.1} parent=1 // loop_header
      %s15 = sphi 0, %s19
      %p16 = scmp.ge.s32.totalorder %s15, 4
      %s25 = sphi 0, %s27
      %s28 = sphi 0, %s25
      %s29 = sphi 0, %s28
      %s45 = sphi 0, %s29
      %s49 = sphi 0, %s49
      %s51 = sphi 0, %s49
      %s52 = sphi 0, %s51
      %s66 = sphi 0, %s52
      %s70 = sphi 0, %s70
      %s72 = sphi 0, %s70
      %s73 = sphi 0, %s72
      %s87 = sphi 0, %s73
      %s93 = sphi 0, %s95
      %s96 = sphi 0, %s93
      %s97 = sphi 0, %s96
      %s113 = sphi 0, %s97
    $region4: #{tpu_custom_call.1} parent=1 // loop_header_branch
      %18 = sbr.rel (%p16) target = $region8
    $region5: #{tpu_custom_call.1} parent=1 // loop_body
      %s20 = ssub.s32 %s15, 1
      %s21 = ssub.s32 %s15, 2
      %s22 = sadd.s32 %s15, 1
      %s23 = ssub.s32 %s15, %s22
      %p24 = scmp.eq.s32.totalorder %s23, 0
      %s26 = sadd.s32 %s25, 1
      %s27 = scalar_select %p24, %s25, %s26
      %p30 = pneg %p24
      %p31 = scmp.eq.s32.totalorder %s15, 1
      %p32 = por %p30, %p31
      %p33 = scmp.ne.s32.totalorder %s25, %s28
      %p34 = scmp.eq.s32.totalorder %s15, 0
      %p35 = por %p33, %p34
      %p36 = scmp.ne.s32.totalorder %s25, %s28
      %p37 = scmp.eq.s32.totalorder %s20, 1
      %p38 = por %p36, %p37
      %p39 = scmp.ne.s32.totalorder %s28, %s29
      %p40 = scmp.eq.s32.totalorder %s20, 0
      %p41 = por %p39, %p40
      %p42 = scmp.ne.s32.totalorder %s28, %s29
      %p43 = scmp.eq.s32.totalorder %s21, 1
      %p44 = por %p42, %p43
      %p46 = scmp.ne.s32.totalorder %s29, %s45
      %p47 = scmp.eq.s32.totalorder %s21, 0
      %p48 = por %p46, %p47
      %s50 = sadd.s32 %s49, 1
      %p53 = scmp.eq.s32.totalorder %s15, 1
      %p54 = scmp.ne.s32.totalorder %s49, %s51
      %p55 = scmp.eq.s32.totalorder %s15, 0
      %p56 = por %p54, %p55
      %p57 = scmp.ne.s32.totalorder %s49, %s51
      %p58 = scmp.eq.s32.totalorder %s20, 1
      %p59 = por %p57, %p58
      %p60 = scmp.ne.s32.totalorder %s51, %s52
      %p61 = scmp.eq.s32.totalorder %s20, 0
      %p62 = por %p60, %p61
      %p63 = scmp.ne.s32.totalorder %s51, %s52
      %p64 = scmp.eq.s32.totalorder %s21, 1
      %p65 = por %p63, %p64
      %p67 = scmp.ne.s32.totalorder %s52, %s66
      %p68 = scmp.eq.s32.totalorder %s21, 0
      %p69 = por %p67, %p68
      %s71 = sadd.s32 %s70, 1
      %p74 = scmp.eq.s32.totalorder %s15, 1
      %p75 = scmp.ne.s32.totalorder %s70, %s72
      %p76 = scmp.eq.s32.totalorder %s15, 0
      %p77 = por %p75, %p76
      %p78 = scmp.ne.s32.totalorder %s70, %s72
      %p79 = scmp.eq.s32.totalorder %s20, 1
      %p80 = por %p78, %p79
      %p81 = scmp.ne.s32.totalorder %s72, %s73
      %p82 = scmp.eq.s32.totalorder %s20, 0
      %p83 = por %p81, %p82
      %p84 = scmp.ne.s32.totalorder %s72, %s73
      %p85 = scmp.eq.s32.totalorder %s21, 1
      %p86 = por %p84, %p85
      %p88 = scmp.ne.s32.totalorder %s73, %s87
      %p89 = scmp.eq.s32.totalorder %s21, 0
      %p90 = por %p88, %p89
      %s91 = ssub.s32 %s15, %s22
      %p92 = scmp.eq.s32.totalorder %s91, 0
      %s94 = sadd.s32 %s93, 1
      %s95 = scalar_select %p92, %s93, %s94
      %p98 = pneg %p92
      %p99 = scmp.eq.s32.totalorder %s15, 1
      %p100 = por %p98, %p99
      %p101 = scmp.ne.s32.totalorder %s93, %s96
      %p102 = scmp.eq.s32.totalorder %s15, 0
      %p103 = por %p101, %p102
      %p104 = scmp.ne.s32.totalorder %s93, %s96
      %p105 = scmp.eq.s32.totalorder %s20, 1
      %p106 = por %p104, %p105
      %p107 = scmp.ne.s32.totalorder %s96, %s97
      %p108 = scmp.eq.s32.totalorder %s20, 0
      %p109 = por %p107, %p108
      %p110 = scmp.ne.s32.totalorder %s96, %s97
      %p111 = scmp.eq.s32.totalorder %s21, 1
      %p112 = por %p110, %p111
      %p114 = scmp.ne.s32.totalorder %s97, %s113
      %p115 = scmp.eq.s32.totalorder %s21, 0
      %p116 = por %p114, %p115
      %p117 = scmp.le.s32.totalorder 1, %s15
      %p118 = scmp.lt.s32.totalorder %s15, 3
      %p119 = pnand %p117, %p118
      %p120 = pneg %p119
      // Predicated region
      $region9: #{tpu_custom_call.1} parent=5 // pred_check
        _
      $region10: #{tpu_custom_call.1} parent=5 // pred_check_branch
        %122 = sbr.rel (%p119) target = $region12
      $region11: #{tpu_custom_call.1} parent=5 // pred_region
        %s123 = ssub.s32 %s15, 1
        // Predicated region
        $region13: #{tpu_custom_call.1} parent=11 // pred_check
          %p124 = pneg %p62
        $region14: #{tpu_custom_call.1} parent=11 // pred_check_branch
          %126 = sbr.rel (%p124) target = $region16
        $region15: #{tpu_custom_call.1} parent=11 // pred_region
          _
        $region16: #{tpu_custom_call.1} parent=11 // pred_fallthru
          _
        // Predicated region
        $region17: #{tpu_custom_call.1} parent=11 // pred_check
          %p127 = pneg %p83
        $region18: #{tpu_custom_call.1} parent=11 // pred_check_branch
          %129 = sbr.rel (%p127) target = $region20
        $region19: #{tpu_custom_call.1} parent=11 // pred_region
          _
        $region20: #{tpu_custom_call.1} parent=11 // pred_fallthru
          _
      $region12: #{tpu_custom_call.1} parent=5 // pred_fallthru
        _
      %p130 = scmp.lt.s32.totalorder %s15, 2
      // Predicated region
      $region21: #{tpu_custom_call.1} parent=5 // pred_check
        %p131 = pneg %p130
      $region22: #{tpu_custom_call.1} parent=5 // pred_check_branch
        %133 = sbr.rel (%p131) target = $region24
      $region23: #{tpu_custom_call.1} parent=5 // pred_region
        // Predicated region
        $region25: #{tpu_custom_call.1} parent=23 // pred_check
          %p134 = pneg %p35
        $region26: #{tpu_custom_call.1} parent=23 // pred_check_branch
          %136 = sbr.rel (%p134) target = $region28
        $region27: #{tpu_custom_call.1} parent=23 // pred_region
          %s137 = sand.u32 %s25, 1
          %s138 = scalar_lea.sflag [#allocation3], %s137
          %s139 = sand.u32 %s25, 1
          %s140 = smul.addr %s139, 64
          %s141 = scalar_lea.vmem [#allocation2], %s140
          %s143 = ssub.s32 1024, 1024
          %144 = vsyncadd %s138, %s143
          %s145 = smul.addr %s15, 8
          %s146 = smul.addr %s145, 128
          %s147 = scalar_lea.hbm %s0, %s146
          %s148 = sshll.u32 %s141, 4
          %s149 = int_to_ptr.vmem [resolvable:$true] %s148
          %154 = dma.hbm_to_vmem [thread:$0]  %s147, 1024, %s149, %s138, 256, 256, 16
        $region28: #{tpu_custom_call.1} parent=23 // pred_fallthru
          _
      $region24: #{tpu_custom_call.1} parent=5 // pred_fallthru
        _
      %p155 = scmp.le.s32.totalorder 1, %s15
      %p156 = scmp.lt.s32.totalorder %s15, 3
      %p157 = pnand %p155, %p156
      %p158 = pneg %p157
      // Predicated region
      $region29: #{tpu_custom_call.1} parent=5 // pred_check
        _
      $region30: #{tpu_custom_call.1} parent=5 // pred_check_branch
        %160 = sbr.rel (%p157) target = $region32
      $region31: #{tpu_custom_call.1} parent=5 // pred_region
        %s161 = ssub.s32 %s15, 1
        %s162 = sand.u32 %s28, 1
        %s163 = scalar_lea.sflag [#allocation3], %s162
        %s164 = sand.u32 %s28, 1
        %s165 = smul.addr %s164, 64
        %s166 = scalar_lea.vmem [#allocation2], %s165
        // Predicated region
        $region33: #{tpu_custom_call.1} parent=31 // pred_check
          %p167 = pneg %p41
        $region34: #{tpu_custom_call.1} parent=31 // pred_check_branch
          %169 = sbr.rel (%p167) target = $region36
        $region35: #{tpu_custom_call.1} parent=31 // pred_region
          %170 = dma.done %s163, 1024
        $region36: #{tpu_custom_call.1} parent=31 // pred_fallthru
          _
        %s171 = sand.u32 %s28, 1
        %s172 = scalar_lea.sflag [#allocation3], %s171
        %s173 = sand.u32 %s28, 1
        %s174 = smul.addr %s173, 64
        %s175 = scalar_lea.vmem [#allocation2], %s174
        %p176 = pneg %p41
        %p177 = pneg %p38
        %p178 = pneg %p62
        %p179 = pneg %p59
        %p180 = pneg %p83
        %p181 = pneg %p80
        %p182 = pneg %p109
        %p183 = pneg %p106
        %s184 = sand.u32 %s96, 1
        %s185 = scalar_lea.sflag [#allocation4], %s184
        %s186 = sand.u32 %s96, 1
        %s187 = smul.addr %s186, 64
        %s188 = scalar_lea.vmem [#allocation5], %s187
        %v189 = vld [vmem:[%s166] sm:$0xff]
        %v190 = vld [vmem:[%s166 + $0x8] sm:$0xff]
        %v191 = vld [vmem:[%s166 + $0x10] sm:$0xff]
        %v192 = vld [vmem:[%s166 + $0x18] sm:$0xff]
        %v193 = vld [vmem:[%s166 + $0x20] sm:$0xff]
        %v194 = vld [vmem:[%s166 + $0x28] sm:$0xff]
        %v195 = vld [vmem:[%s166 + $0x30] sm:$0xff]
        %v196 = vld [vmem:[%s166 + $0x38] sm:$0xff]
        %v197 = vadd.f32 %v189, %v190
        %198 = vadd.xlane.f32.xlu0 %v197
        %v199 = vpop.xlane.xlu0 %198
        %v200 = vadd.f32 %v191, %v192
        %201 = vadd.xlane.f32.xlu0 %v200
        %v202 = vpop.xlane.xlu0 %201
        %v203 = vadd.f32 %v193, %v194
        %204 = vadd.xlane.f32.xlu0 %v203
        %v205 = vpop.xlane.xlu0 %204
        %v206 = vadd.f32 %v195, %v196
        %207 = vadd.xlane.f32.xlu0 %v206
        %v208 = vpop.xlane.xlu0 %207
        %v209 = vmul.f32 %v199, 0.00390625
        %v210 = vmul.f32 %v202, 0.00390625
        %v211 = vmul.f32 %v205, 0.00390625
        %v212 = vmul.f32 %v208, 0.00390625
        %v213 = vld [vmem:[%s1] sm:$0xff]
        %v214 = vld [vmem:[%s1 + $0x8] sm:$0xff]
        %v215 = vld [vmem:[%s1 + $0x10] sm:$0xff]
        %v216 = vld [vmem:[%s1 + $0x18] sm:$0xff]
        %v217 = vmul.f32 %v209, %v213
        %v218 = vmul.f32 %v210, %v214
        %v219 = vmul.f32 %v211, %v215
        %v220 = vmul.f32 %v212, %v216
        %vm221 = vcmask 15360
        %v222 = vsel %vm221, %v217, 0.0
        %v223 = vsel %vm221, %v218, 0.0
        %v224 = vadd.f32 %v222, %v223
        %v225 = vsel %vm221, %v219, 0.0
        %v226 = vadd.f32 %v224, %v225
        %v227 = vsel %vm221, %v220, 0.0
        %v228 = vadd.f32 %v226, %v227
        %v229 = vrot.slane %v228, 4
        %v230 = vadd.f32 %v228, %v229
        %v231 = vrot.slane %v230, 2
        %v232 = vadd.f32 %v230, %v231
        %v233 = vrot.slane %v232, 1
        %v234 = vadd.f32 %v232, %v233
        %v235 = vmax.f32 %v234, 0.0
        %237 = vbcast.lane.b32.xlu0 %v235, 256
        %v238 = vpop.permute.xlu0 %237
        %v239 = vld [vmem:[%s2] sm:$0x3]
        %v240 = vmul.f32 %v238, %v239
        %vm241 = vcmask 254976
        %v242 = vsel %vm241, %v240, 0.0
        %v243 = vrot.slane %v242, 4
        %v244 = vadd.f32 %v242, %v243
        %v245 = vrot.slane %v244, 2
        %v246 = vadd.f32 %v244, %v245
        %v247 = vrot.slane %v246, 1
        %v248 = vadd.f32 %v246, %v247
        %v249 = vsub.f32 0.0, %v248
        %v250 = vmul.f32 %v249, 1.442695
        %v251 = vpow.pop %v250
        %v252 = vadd.f32 %v251, 1.0
        %v253 = vrcp.pop %v252
        %v254 = vmul.f32 1.0, %v253
        %256 = vbcast.lane.b32.xlu0 %v254, 256
        %v257 = vpop.permute.xlu0 %256
        %s259 = sor.u32 256, 8
        %260 = vbcast.lane.b32.xlu0 %v254, %s259
        %v261 = vpop.permute.xlu0 %260
        %s263 = sor.u32 256, 16
        %264 = vbcast.lane.b32.xlu0 %v254, %s263
        %v265 = vpop.permute.xlu0 %264
        %s267 = sor.u32 256, 24
        %268 = vbcast.lane.b32.xlu0 %v254, %s267
        %v269 = vpop.permute.xlu0 %268
        %v270 = vmul.f32 %v189, %v257
        %v271 = vmul.f32 %v190, %v257
        %v272 = vmul.f32 %v191, %v261
        %v273 = vmul.f32 %v192, %v261
        %v274 = vmul.f32 %v193, %v265
        %v275 = vmul.f32 %v194, %v265
        %v276 = vmul.f32 %v195, %v269
        %v277 = vmul.f32 %v196, %v269
        %278 = vst [vmem:[%s188] sm:$0xff] %v270
        %279 = vst [vmem:[%s188 + $0x8] sm:$0xff] %v271
        %280 = vst [vmem:[%s188 + $0x10] sm:$0xff] %v272
        %281 = vst [vmem:[%s188 + $0x18] sm:$0xff] %v273
        %282 = vst [vmem:[%s188 + $0x20] sm:$0xff] %v274
        %283 = vst [vmem:[%s188 + $0x28] sm:$0xff] %v275
        %284 = vst [vmem:[%s188 + $0x30] sm:$0xff] %v276
        %285 = vst [vmem:[%s188 + $0x38] sm:$0xff] %v277
        %s286 = sand.u32 %s96, 1
        %s287 = scalar_lea.sflag [#allocation4], %s286
        %s288 = sand.u32 %s96, 1
        %s289 = smul.addr %s288, 64
        %s290 = scalar_lea.vmem [#allocation5], %s289
        // Predicated region
        $region37: #{tpu_custom_call.1} parent=31 // pred_check
          %p291 = pneg %p106
        $region38: #{tpu_custom_call.1} parent=31 // pred_check_branch
          %293 = sbr.rel (%p291) target = $region40
        $region39: #{tpu_custom_call.1} parent=31 // pred_region
          %s295 = ssub.s32 1024, 1024
          %296 = vsyncadd %s287, %s295
          %s297 = smul.addr %s20, 8
          %s298 = smul.addr %s297, 128
          %s299 = scalar_lea.hbm %s3, %s298
          %s300 = sshll.u32 %s290, 4
          %s301 = int_to_ptr.vmem [resolvable:$true] %s300
          %306 = dma.vmem_to_hbm [thread:$0]  %s301, 1024, %s299, %s287, 256, 256, 16
        $region40: #{tpu_custom_call.1} parent=31 // pred_fallthru
          _
      $region32: #{tpu_custom_call.1} parent=5 // pred_fallthru
        _
      %p307 = scmp.le.s32.totalorder 2, %s15
      // Predicated region
      $region41: #{tpu_custom_call.1} parent=5 // pred_check
        %p308 = pneg %p307
      $region42: #{tpu_custom_call.1} parent=5 // pred_check_branch
        %310 = sbr.rel (%p308) target = $region44
      $region43: #{tpu_custom_call.1} parent=5 // pred_region
        %s311 = ssub.s32 %s15, 2
        // Predicated region
        $region45: #{tpu_custom_call.1} parent=43 // pred_check
          %p312 = pneg %p112
        $region46: #{tpu_custom_call.1} parent=43 // pred_check_branch
          %314 = sbr.rel (%p312) target = $region48
        $region47: #{tpu_custom_call.1} parent=43 // pred_region
          %s315 = sand.u32 %s97, 1
          %s316 = scalar_lea.sflag [#allocation4], %s315
          %s317 = sand.u32 %s97, 1
          %s318 = smul.addr %s317, 64
          %s319 = scalar_lea.vmem [#allocation5], %s318
          %320 = dma.done %s316, 1024
        $region48: #{tpu_custom_call.1} parent=43 // pred_fallthru
          _
      $region44: #{tpu_custom_call.1} parent=5 // pred_fallthru
        _
    $region6: #{tpu_custom_call.1} parent=1 // loop_footer
      %s19 = sadd.s32 1, %s15
    $region7: #{tpu_custom_call.1} parent=1 // loop_footer_branch
      %14 = sbr.rel target = $region3
    $region8: #{tpu_custom_call.1} parent=1 // loop_exit
      _
    %321 = vsyncpa [#allocation3], 1
    %s322 = scalar_lea.sflag [#allocation3], 1
    %323 = vsyncpa %s322, 1
    %324 = vsyncpa [#allocation4], 1
    %s325 = scalar_lea.sflag [#allocation4], 1
    %326 = vsyncpa %s325, 1

</llo_original>
